<compile_context>
chip_gen: v5e
topology: v5e:2x2
jax: 0.10.0
libtpu: 0.0.40
codegen_flags: <defaults>
</compile_context>

<pallas_src>
import functools

import numpy as np
import jax
import jax.numpy as jnp
from jax.experimental import pallas as pl
from jax.experimental.pallas import tpu as pltpu

TILE_COLS = 128
SUBLANES = 8
NUM_CORES = 2            # leading "parallel" grid axis; shards across v7x's 2 TCs, no-op elsewhere
MAX_BLOCK_ROWS = 2048    # (2048,128) f32 = 1 MiB/operand/step
VMEM_LIMIT_BYTES = 32 * 1024 * 1024


def _round_up(x, m):
    return ((x + m - 1) // m) * m


def _plan(n_elems):
    """Choose (block_rows, tiles_per_core, padded_rows) for a flat f32 vector of n_elems.

    tiles_per_core is picked first so block_rows can shrink to the smallest sublane-aligned
    size that covers the work — this minimizes zero-padding (wasted HBM reads)."""
    rows = max(1, -(-n_elems // TILE_COLS))
    per_core_rows = -(-rows // NUM_CORES)
    tiles_per_core = -(-per_core_rows // MAX_BLOCK_ROWS)
    block_rows = _round_up(-(-per_core_rows // tiles_per_core), SUBLANES)
    padded_rows = NUM_CORES * tiles_per_core * block_rows
    return block_rows, tiles_per_core, padded_rows


def _prep_flat(flat, padded_rows):
    """Flat f32 vector -> zero-padded (padded_rows, 128) view."""
    n = flat.shape[0]
    pad = padded_rows * TILE_COLS - n
    v = jnp.pad(flat.astype(jnp.float32), (0, pad))
    return v.reshape(padded_rows, TILE_COLS)


def _partial_rowsum(x):
    # (block_rows, 128) -> (8, 128) partial sums. The reshape groups rows into native
    # (8,128) vreg tiles (layout no-op) and the axis-0 sum is plain VPU adds — the
    # expensive cross-lane reduction is deferred to the wrapper's final jnp.sum.
    return x.reshape(-1, SUBLANES, TILE_COLS).sum(axis=0)


def _wsq_kernel(p_ref, mean_ref, weight_ref, out_ref):
    """Accumulates sum(weight * (p - mean)^2) into a per-core (1,8,128) resident output."""
    @pl.when(pl.program_id(1) == 0)
    def _():
        out_ref[...] = jnp.zeros_like(out_ref)

    d = p_ref[...] - mean_ref[...]
    out_ref[...] += _partial_rowsum(weight_ref[...] * d * d)[None]


def _fused_reg_kernel(p_ref, ewc_prev_ref, fisher_ref, si_prev_ref, omega_ref,
                      ewc_out_ref, si_out_ref):
    """Fused EWC + SI partial sums, sharing a single read of the live parameters p."""
    @pl.when(pl.program_id(1) == 0)
    def _():
        ewc_out_ref[...] = jnp.zeros_like(ewc_out_ref)
        si_out_ref[...] = jnp.zeros_like(si_out_ref)

    p = p_ref[...]
    de = p - ewc_prev_ref[...]
    ds = p - si_prev_ref[...]
    ewc_out_ref[...] += _partial_rowsum(fisher_ref[...] * de * de)[None]
    si_out_ref[...] += _partial_rowsum(omega_ref[...] * ds * ds)[None]


def _make_specs(block_rows, tiles_per_core, n_inputs):
    in_block = pl.BlockSpec((block_rows, TILE_COLS),
                            lambda c, i: (c * tiles_per_core + i, 0))
    out_block = pl.BlockSpec((1, SUBLANES, TILE_COLS), lambda c, i: (c, 0, 0))
    return [in_block] * n_inputs, out_block


@functools.lru_cache(maxsize=None)
def _build_wsq(block_rows, tiles_per_core):
    """Cached (pallas_call + final sum) jitted callable for a given tiling plan."""
    in_specs, out_block = _make_specs(block_rows, tiles_per_core, 3)
    call = pl.pallas_call(
        _wsq_kernel,
        out_shape=jax.ShapeDtypeStruct((NUM_CORES, SUBLANES, TILE_COLS), jnp.float32),
        grid_spec=pltpu.PrefetchScalarGridSpec(
            num_scalar_prefetch=0,
            grid=(NUM_CORES, tiles_per_core),
            in_specs=in_specs,
            out_specs=out_block,
        ),
        compiler_params=pltpu.CompilerParams(
            dimension_semantics=("parallel", "arbitrary"),
            vmem_limit_bytes=VMEM_LIMIT_BYTES,
        ),
    )

    @jax.jit
    def run(p2, mean2, weight2):
        return jnp.sum(call(p2, mean2, weight2))

    return run


@functools.lru_cache(maxsize=None)
def _build_fused(block_rows, tiles_per_core):
    """Cached fused EWC+SI jitted callable for a given tiling plan."""
    in_specs, out_block = _make_specs(block_rows, tiles_per_core, 5)
    call = pl.pallas_call(
        _fused_reg_kernel,
        out_shape=(jax.ShapeDtypeStruct((NUM_CORES, SUBLANES, TILE_COLS), jnp.float32),
                   jax.ShapeDtypeStruct((NUM_CORES, SUBLANES, TILE_COLS), jnp.float32)),
        grid_spec=pltpu.PrefetchScalarGridSpec(
            num_scalar_prefetch=0,
            grid=(NUM_CORES, tiles_per_core),
            in_specs=in_specs,
            out_specs=[out_block, out_block],
        ),
        compiler_params=pltpu.CompilerParams(
            dimension_semantics=("parallel", "arbitrary"),
            vmem_limit_bytes=VMEM_LIMIT_BYTES,
        ),
    )

    @jax.jit
    def run(p2, ewc_prev2, fisher2, si_prev2, omega2):
        ewc_out, si_out = call(p2, ewc_prev2, fisher2, si_prev2, omega2)
        return jnp.sum(ewc_out), jnp.sum(si_out)

    return run


def weighted_sq_diff_sum_prepped(p2, mean2, weight2, block_rows, tiles_per_core):
    """sum(weight * (p - mean)^2) over prepared (padded_rows,128) f32 arrays."""
    return _build_wsq(block_rows, tiles_per_core)(p2, mean2, weight2)


def fused_reg_sums_prepped(p2, ewc_prev2, fisher2, si_prev2, omega2,
                           block_rows, tiles_per_core):
    """Returns (sum(fisher*(p-ewc_prev)^2), sum(omega*(p-si_prev)^2)) reading p once."""
    return _build_fused(block_rows, tiles_per_core)(p2, ewc_prev2, fisher2, si_prev2, omega2)


class ContinualLearnerPallas:
    """JAX/Pallas analogue of ContinualLearner's regularizer state & losses."""

    def __init__(self, params):
        # params: dict name -> jnp array (the "named_parameters" of the classifier)
        self.params = params
        self.si_c = 0
        self.epsilon = 0.1
        self.ewc_lambda = 0
        self.gamma = 1.0
        self.online = True
        self.EWC_task_count = 0
        self.replay_targets = "hard"
        self.KD_temp = 2.0
        # registered buffers
        self.ewc_prev = {}      # {name: prev-task parameter values}
        self.ewc_fisher = {}    # {name: estimated diagonal Fisher}
        self.si_prev = {}       # {name: SI prev-task values}
        self.si_omega = {}      # {name: SI omega}
        self.mask_dict = None
        self.excit_buffer_sizes = []
        # static tiling plan for the flattened parameter vector
        n = sum(int(np.prod(v.shape)) for v in params.values())
        self._n_elems = n
        self._block_rows, self._tiles_per_core, self._padded_rows = _plan(n)
        self._cache = {}        # cached prepared (padded_rows,128) regularizer buffers

    # ---- XdG (mask construction is host-side bookkeeping, as in the original) ----
    def define_XdGmask(self, gating_prop, n_tasks, hidden_sizes, seed=0):
        rng = np.random.RandomState(seed)
        mask_dict = {}
        self.excit_buffer_sizes = list(hidden_sizes)
        for task_id in range(n_tasks):
            mask_dict[task_id + 1] = {}
            for i, n_units in enumerate(hidden_sizes):
                gated = rng.choice(n_units, size=int(gating_prop * n_units), replace=False)
                mask_dict[task_id + 1][i] = gated
        self.mask_dict = mask_dict

    def xdg_gating_masks(self, task):
        assert self.mask_dict is not None
        masks = []
        for i, n_units in enumerate(self.excit_buffer_sizes):
            m = np.ones(n_units, dtype=np.float32)
            m[self.mask_dict[task][i]] = 0.0
            masks.append(jnp.asarray(m))
        return masks

    # ---- flatten / prep helpers ------------------------------------------------
    def _flatten(self, tree):
        return jnp.concatenate(
            [tree[n].reshape(-1).astype(jnp.float32) for n in sorted(self.params)]
        )

    def _prep(self, tree):
        return _prep_flat(self._flatten(tree), self._padded_rows)

    def _cached(self, key, tree):
        if key not in self._cache:
            self._cache[key] = self._prep(tree)
        return self._cache[key]

    def finalize_ewc_buffers(self):
        """Re-cache flattened EWC buffers (call after the estimate_fisher-style update)."""
        self._cache["ewc_prev"] = self._prep(self.ewc_prev)
        self._cache["ewc_fisher"] = self._prep(self.ewc_fisher)

    def finalize_si_buffers(self):
        """Re-cache flattened SI buffers (call after the update_omega-style update)."""
        self._cache["si_prev"] = self._prep(self.si_prev)
        self._cache["si_omega"] = self._prep(self.si_omega)

    # ---- EWC -------------------------------------------------------------------
    def ewc_loss(self):
        if self.EWC_task_count > 0:
            # online EWC: a single unsuffixed buffer scaled by gamma.
            # TODO(synk): offline EWC (online=False) needs per-task suffixed buffers.
            p2 = self._prep(self.params)
            mean2 = self._cached("ewc_prev", self.ewc_prev)
            fisher2 = self._cached("ewc_fisher", self.ewc_fisher)
            s = weighted_sq_diff_sum_prepped(p2, mean2, fisher2,
                                             self._block_rows, self._tiles_per_core)
            return 0.5 * (self.gamma if self.online else 1.0) * s
        return jnp.float32(0.0)

    # ---- SI --------------------------------------------------------------------
    def surrogate_loss(self):
        if not self.si_prev or not self.si_omega:
            return jnp.float32(0.0)
        p2 = self._prep(self.params)
        prev2 = self._cached("si_prev", self.si_prev)
        omega2 = self._cached("si_omega", self.si_omega)
        return weighted_sq_diff_sum_prepped(p2, prev2, omega2,
                                            self._block_rows, self._tiles_per_core)

    # ---- fused EWC + SI (single read of live parameters) ------------------------
    def regularizer_losses(self):
        have_ewc = self.EWC_task_count > 0
        have_si = bool(self.si_prev) and bool(self.si_omega)
        if have_ewc and have_si:
            p2 = self._prep(self.params)
            ewc_s, si_s = fused_reg_sums_prepped(
                p2,
                self._cached("ewc_prev", self.ewc_prev),
                self._cached("ewc_fisher", self.ewc_fisher),
                self._cached("si_prev", self.si_prev),
                self._cached("si_omega", self.si_omega),
                self._block_rows, self._tiles_per_core)
            return 0.5 * (self.gamma if self.online else 1.0) * ewc_s, si_s
        return self.ewc_loss(), self.surrogate_loss()


def _ref_loss(p, mean, w):
    return jnp.sum(w * (p - mean) ** 2)


if __name__ == "__main__":
    key = jax.random.PRNGKey(0)
    k = jax.random.split(key, 12)

    # Small classifier parameter set (the kind of fcE classifier this mixin wraps)
    # hidden layer 1: 64 -> 32, hidden layer 2: 32 -> 32, output: 32 -> 10
    params = {
        "fcE__fcLayer1__linear__weight": jax.random.normal(k[0], (32, 64), jnp.float32) * 0.1,
        "fcE__fcLayer1__linear__bias": jax.random.normal(k[1], (32,), jnp.float32) * 0.1,
        "fcE__fcLayer2__linear__weight": jax.random.normal(k[2], (32, 32), jnp.float32) * 0.1,
        "fcE__fcLayer2__linear__bias": jax.random.normal(k[3], (32,), jnp.float32) * 0.1,
        "classifier__weight": jax.random.normal(k[4], (10, 32), jnp.float32) * 0.1,
        "classifier__bias": jax.random.normal(k[5], (10,), jnp.float32) * 0.1,
    }

    model = ContinualLearnerPallas(params)
    model.gamma = 1.0
    model.online = True
    model.EWC_task_count = 1

    # Deterministic EWC / SI buffers (as would be produced by estimate_fisher / update_omega)
    kk = jax.random.split(k[6], len(params) * 4)
    j = 0
    for n in sorted(params):
        shp = params[n].shape
        model.ewc_prev[n] = params[n] + 0.05 * jax.random.normal(kk[j], shp, jnp.float32); j += 1
        model.ewc_fisher[n] = jnp.abs(jax.random.normal(kk[j], shp, jnp.float32)); j += 1
        model.si_prev[n] = params[n] + 0.02 * jax.random.normal(kk[j], shp, jnp.float32); j += 1
        model.si_omega[n] = jnp.abs(jax.random.normal(kk[j], shp, jnp.float32)); j += 1
    model.finalize_ewc_buffers()
    model.finalize_si_buffers()

    # XdG mask bookkeeping (host-side, matches define_XdGmask / apply_XdGmask semantics)
    model.define_XdGmask(gating_prop=0.5, n_tasks=3, hidden_sizes=[32, 32], seed=0)
    _ = model.xdg_gating_masks(task=1)

    # Separate losses (single-regularizer kernel) and fused path (shared read of p)
    ewc = jax.block_until_ready(model.ewc_loss())
    si = jax.block_until_ready(model.surrogate_loss())
    ewc_f, si_f = model.regularizer_losses()
    ewc_f = jax.block_until_ready(ewc_f)
    si_f = jax.block_until_ready(si_f)

    # Pure-JAX reference check
    p = model._flatten(params)
    ewc_ref = 0.5 * model.gamma * _ref_loss(p, model._flatten(model.ewc_prev),
                                            model._flatten(model.ewc_fisher))
    si_ref = _ref_loss(p, model._flatten(model.si_prev), model._flatten(model.si_omega))

    assert jnp.allclose(ewc, ewc_ref, rtol=1e-5, atol=1e-5), (ewc, ewc_ref)
    assert jnp.allclose(si, si_ref, rtol=1e-5, atol=1e-5), (si, si_ref)
    assert jnp.allclose(ewc_f, ewc_ref, rtol=1e-5, atol=1e-5), (ewc_f, ewc_ref)
    assert jnp.allclose(si_f, si_ref, rtol=1e-5, atol=1e-5), (si_f, si_ref)

    # Larger synthetic check to exercise multi-tile / multi-core accumulation + padding
    kb = jax.random.split(k[7], 3)
    n_big = 600_001
    pb = jax.random.normal(kb[0], (n_big,), jnp.float32)
    mb = jax.random.normal(kb[1], (n_big,), jnp.float32)
    wb = jnp.abs(jax.random.normal(kb[2], (n_big,), jnp.float32))
    br, tpc, prows = _plan(n_big)
    big = jax.block_until_ready(
        weighted_sq_diff_sum_prepped(_prep_flat(pb, prows), _prep_flat(mb, prows),
                                     _prep_flat(wb, prows), br, tpc))
    big_ref = _ref_loss(pb, mb, wb)
    assert jnp.allclose(big, big_ref, rtol=1e-4, atol=1e-3), (big, big_ref)

    print("KERNEL_OK")
</pallas_src>

<mosaic_0001>
module attributes {stable_mosaic.version = 11 : i64} {
  func.func @_wsq_kernel(%arg0: i32, %arg1: i32, %arg2: memref<16x128xf32, #tpu.memory_space<vmem>>, %arg3: memref<16x128xf32, #tpu.memory_space<vmem>>, %arg4: memref<16x128xf32, #tpu.memory_space<vmem>>, %arg5: memref<1x8x128xf32, #tpu.memory_space<vmem>>) attributes {dimension_semantics = [#tpu.dimension_semantics<parallel>, #tpu.dimension_semantics<arbitrary>], iteration_bounds = array<i64: 2, 1>, scalar_prefetch = 0 : i64, scratch_operands = 0 : i64, tpu.core_type = #tpu.core_type<tc>, window_params = [{transform_indices = @transform_0, window_bounds = array<i64: 16, 128>}, {transform_indices = @transform_1, window_bounds = array<i64: 16, 128>}, {transform_indices = @transform_2, window_bounds = array<i64: 16, 128>}, {transform_indices = @transform_3, window_bounds = array<i64: 1, 8, 128>}]} {
    %c0_i32 = arith.constant 0 : i32
    %0 = arith.cmpi eq, %arg1, %c0_i32 : i32
    %1 = arith.extui %0 : i1 to i32
    %c0_i32_0 = arith.constant 0 : i32
    %2 = arith.cmpi ne, %1, %c0_i32_0 : i32
    scf.if %2 {
      %cst_12 = arith.constant 0.000000e+00 : f32
      %15 = vector.broadcast %cst_12 : f32 to vector<1x8x128xf32>
      %c0_13 = arith.constant 0 : index
      %c0_14 = arith.constant 0 : index
      %c0_15 = arith.constant 0 : index
      %16 = vector.load %arg5[%c0_13, %c0_14, %c0_15] : memref<1x8x128xf32, #tpu.memory_space<vmem>>, vector<1x8x128xf32>
      tpu.vector_store %arg5[%c0_13, %c0_14, %c0_15], %15 {strides = array<i32>} : memref<1x8x128xf32, #tpu.memory_space<vmem>>, vector<1x8x128xf32>,
    } else {
    }
    %c0 = arith.constant 0 : index
    %c0_1 = arith.constant 0 : index
    %3 = vector.load %arg2[%c0, %c0_1] : memref<16x128xf32, #tpu.memory_space<vmem>>, vector<16x128xf32>
    %c0_2 = arith.constant 0 : index
    %c0_3 = arith.constant 0 : index
    %4 = vector.load %arg3[%c0_2, %c0_3] : memref<16x128xf32, #tpu.memory_space<vmem>>, vector<16x128xf32>
    %5 = arith.subf %3, %4 : vector<16x128xf32>
    %c0_4 = arith.constant 0 : index
    %c0_5 = arith.constant 0 : index
    %c0_6 = arith.constant 0 : index
    %6 = vector.load %arg5[%c0_4, %c0_5, %c0_6] : memref<1x8x128xf32, #tpu.memory_space<vmem>>, vector<1x8x128xf32>
    %c0_7 = arith.constant 0 : index
    %c0_8 = arith.constant 0 : index
    %7 = vector.load %arg4[%c0_7, %c0_8] : memref<16x128xf32, #tpu.memory_space<vmem>>, vector<16x128xf32>
    %8 = arith.mulf %7, %5 : vector<16x128xf32>
    %9 = arith.mulf %8, %5 : vector<16x128xf32>
    %10 = vector.shape_cast %9 : vector<16x128xf32> to vector<2x8x128xf32>
    %cst = arith.constant dense<0.000000e+00> : vector<8x128xf32>
    %11 = vector.multi_reduction <add>, %10, %cst [0] : vector<2x8x128xf32> to vector<8x128xf32>
    %12 = vector.shape_cast %11 : vector<8x128xf32> to vector<1x8x128xf32>
    %13 = arith.addf %6, %12 : vector<1x8x128xf32>
    %c0_9 = arith.constant 0 : index
    %c0_10 = arith.constant 0 : index
    %c0_11 = arith.constant 0 : index
    %14 = vector.load %arg5[%c0_9, %c0_10, %c0_11] : memref<1x8x128xf32, #tpu.memory_space<vmem>>, vector<1x8x128xf32>
    tpu.vector_store %arg5[%c0_9, %c0_10, %c0_11], %13 {strides = array<i32>} : memref<1x8x128xf32, #tpu.memory_space<vmem>>, vector<1x8x128xf32>,
    return
  }
  func.func @transform_0(%arg0: i32, %arg1: i32) -> (i32, i32) {
    %c1_i32 = arith.constant 1 : i32
    %0 = arith.muli %arg0, %c1_i32 : i32
    %1 = arith.addi %0, %arg1 : i32
    %c0_i32 = arith.constant 0 : i32
    %c0_i32_0 = arith.constant 0 : i32
    return %1, %c0_i32 : i32, i32
  }
  func.func @transform_1(%arg0: i32, %arg1: i32) -> (i32, i32) {
    %c1_i32 = arith.constant 1 : i32
    %0 = arith.muli %arg0, %c1_i32 : i32
    %1 = arith.addi %0, %arg1 : i32
    %c0_i32 = arith.constant 0 : i32
    %c0_i32_0 = arith.constant 0 : i32
    return %1, %c0_i32 : i32, i32
  }
  func.func @transform_2(%arg0: i32, %arg1: i32) -> (i32, i32) {
    %c1_i32 = arith.constant 1 : i32
    %0 = arith.muli %arg0, %c1_i32 : i32
    %1 = arith.addi %0, %arg1 : i32
    %c0_i32 = arith.constant 0 : i32
    %c0_i32_0 = arith.constant 0 : i32
    return %1, %c0_i32 : i32, i32
  }
  func.func @transform_3(%arg0: i32, %arg1: i32) -> (i32, i32, i32) {
    %c0_i32 = arith.constant 0 : i32
    %c0_i32_0 = arith.constant 0 : i32
    %c0_i32_1 = arith.constant 0 : i32
    return %arg0, %c0_i32, %c0_i32_0 : i32, i32, i32
  }
}

</mosaic_0001>

<llo_original>
// kernel: run.1
$region0: #{run.1}
  #allocation0 [shape = 'u32[]', space=smem, size = 0x4, offset = 0x4, fixed_abs, tag = 'smem constant byte address 0x4 - core index']
  #allocation1 [shape = 'u32[72,128]{1,0:T(1,128)}', space=vmem, size = 0x9000, scoped, tag = 'internal scratch']
  %s0 = inlined_call_operand.hbm [shape: f32[32,128], index: 0, kind: input, shape index: {}]
  %s1 = inlined_call_operand.hbm [shape: f32[32,128], index: 1, kind: input, shape index: {}]
  %s2 = inlined_call_operand.hbm [shape: f32[32,128], index: 2, kind: input, shape index: {}]
  %s3 = inlined_call_operand.vmem [shape: f32[2,8,128], index: 3, kind: output, shape index: {}]
  %s4 = sld [smem:[#allocation0]]
  $region61: #{run.1} parent=0
    _
  %s6 = ssub.s32 1, %s4
  %s7 = scalar_select 0, %s6, %s4
  $region1: #{run.1} parent=0
    #allocation2 [shape = 'u8[16384]{0}', space=vmem, size = 0x4000, scoped, tag = 'input window, operand 0']
    #allocation3 [shape = 's32[2]{0}', space=sflag, size = 0x8, scoped, tag = 'scoped memory for run.1']
    #allocation4 [shape = 'u8[16384]{0}', space=vmem, size = 0x4000, scoped, tag = 'input window, operand 1']
    #allocation5 [shape = 's32[2]{0}', space=sflag, size = 0x8, scoped, tag = 'scoped memory for run.1']
    #allocation6 [shape = 'u8[16384]{0}', space=vmem, size = 0x4000, scoped, tag = 'input window, operand 2']
    %8 = vsyncpa [#allocation3], 0
    %s9 = scalar_lea.sflag [#allocation3], 1
    %10 = vsyncpa %s9, 0
    %11 = vsyncpa [#allocation5], 0
    %s12 = scalar_lea.sflag [#allocation5], 1
    %13 = vsyncpa %s12, 0
    loop: start=0, step=1, limit=4
    $region2: #{run.1} parent=1 // loop_pre_header
      _
    $region3: #{run.1} parent=1 // loop_header
      %s15 = sphi 0, %s19
      %p16 = scmp.ge.s32.totalorder %s15, 4
      %s22 = sphi 0, %s34
      %s23 = sphi 0, %s30
      %s24 = sphi 0, %s22
      %s25 = sphi 0, %s23
      %s26 = sphi 0, %s24
      %s27 = sphi 0, %s25
      %s39 = sphi 0, %s41
      %s42 = sphi 0, %s39
      %s43 = sphi 0, %s42
      %s59 = sphi 0, %s43
      %s67 = sphi 0, %s69
      %s70 = sphi 0, %s67
      %s71 = sphi 0, %s70
      %s87 = sphi 0, %s71
      %s95 = sphi 0, %s97
      %s98 = sphi 0, %s95
      %s99 = sphi 0, %s98
      %s115 = sphi 0, %s99
      %s121 = sphi 0, %s123
      %s124 = sphi 0, %s121
      %s125 = sphi 0, %s124
      %s141 = sphi 0, %s125
    $region4: #{run.1} parent=1 // loop_header_branch
      %18 = sbr.rel (%p16) target = $region8
    $region5: #{run.1} parent=1 // loop_body
      %s20 = ssub.s32 %s15, 1
      %s21 = ssub.s32 %s15, 2
      %s28 = sadd.s32 1, %s23
      %p29 = scmp.ge.s32.totalorder %s28, 1
      %s30 = scalar_select %p29, 0, %s28
      %s31 = sadd.s32 1, %s22
      %s32 = scalar_select %p29, %s31, %s22
      %p33 = scmp.ge.s32.totalorder %s32, 2
      %s34 = scalar_select %p33, 0, %s32
      %s35 = sadd.s32 %s22, %s23
      %s36 = sadd.s32 %s34, %s30
      %s37 = ssub.s32 %s35, %s36
      %p38 = scmp.eq.s32.totalorder %s37, 0
      %s40 = sadd.s32 %s39, 1
      %s41 = scalar_select %p38, %s39, %s40
      %p44 = pneg %p38
      %p45 = scmp.eq.s32.totalorder %s15, 1
      %p46 = por %p44, %p45
      %p47 = scmp.ne.s32.totalorder %s39, %s42
      %p48 = scmp.eq.s32.totalorder %s15, 0
      %p49 = por %p47, %p48
      %p50 = scmp.ne.s32.totalorder %s39, %s42
      %p51 = scmp.eq.s32.totalorder %s20, 1
      %p52 = por %p50, %p51
      %p53 = scmp.ne.s32.totalorder %s42, %s43
      %p54 = scmp.eq.s32.totalorder %s20, 0
      %p55 = por %p53, %p54
      %p56 = scmp.ne.s32.totalorder %s42, %s43
      %p57 = scmp.eq.s32.totalorder %s21, 1
      %p58 = por %p56, %p57
      %p60 = scmp.ne.s32.totalorder %s43, %s59
      %p61 = scmp.eq.s32.totalorder %s21, 0
      %p62 = por %p60, %p61
      %s63 = sadd.s32 %s22, %s23
      %s64 = sadd.s32 %s34, %s30
      %s65 = ssub.s32 %s63, %s64
      %p66 = scmp.eq.s32.totalorder %s65, 0
      %s68 = sadd.s32 %s67, 1
      %s69 = scalar_select %p66, %s67, %s68
      %p72 = pneg %p66
      %p73 = scmp.eq.s32.totalorder %s15, 1
      %p74 = por %p72, %p73
      %p75 = scmp.ne.s32.totalorder %s67, %s70
      %p76 = scmp.eq.s32.totalorder %s15, 0
      %p77 = por %p75, %p76
      %p78 = scmp.ne.s32.totalorder %s67, %s70
      %p79 = scmp.eq.s32.totalorder %s20, 1
      %p80 = por %p78, %p79
      %p81 = scmp.ne.s32.totalorder %s70, %s71
      %p82 = scmp.eq.s32.totalorder %s20, 0
      %p83 = por %p81, %p82
      %p84 = scmp.ne.s32.totalorder %s70, %s71
      %p85 = scmp.eq.s32.totalorder %s21, 1
      %p86 = por %p84, %p85
      %p88 = scmp.ne.s32.totalorder %s71, %s87
      %p89 = scmp.eq.s32.totalorder %s21, 0
      %p90 = por %p88, %p89
      %s91 = sadd.s32 %s22, %s23
      %s92 = sadd.s32 %s34, %s30
      %s93 = ssub.s32 %s91, %s92
      %p94 = scmp.eq.s32.totalorder %s93, 0
      %s96 = sadd.s32 %s95, 1
      %s97 = scalar_select %p94, %s95, %s96
      %p100 = pneg %p94
      %p101 = scmp.eq.s32.totalorder %s15, 1
      %p102 = por %p100, %p101
      %p103 = scmp.ne.s32.totalorder %s95, %s98
      %p104 = scmp.eq.s32.totalorder %s15, 0
      %p105 = por %p103, %p104
      %p106 = scmp.ne.s32.totalorder %s95, %s98
      %p107 = scmp.eq.s32.totalorder %s20, 1
      %p108 = por %p106, %p107
      %p109 = scmp.ne.s32.totalorder %s98, %s99
      %p110 = scmp.eq.s32.totalorder %s20, 0
      %p111 = por %p109, %p110
      %p112 = scmp.ne.s32.totalorder %s98, %s99
      %p113 = scmp.eq.s32.totalorder %s21, 1
      %p114 = por %p112, %p113
      %p116 = scmp.ne.s32.totalorder %s99, %s115
      %p117 = scmp.eq.s32.totalorder %s21, 0
      %p118 = por %p116, %p117
      %s119 = ssub.s32 %s22, %s34
      %p120 = scmp.eq.s32.totalorder %s119, 0
      %s122 = sadd.s32 %s121, 1
      %s123 = scalar_select %p120, %s121, %s122
      %p126 = pneg %p120
      %p127 = scmp.eq.s32.totalorder %s15, 1
      %p128 = por %p126, %p127
      %p129 = scmp.ne.s32.totalorder %s121, %s124
      %p130 = scmp.eq.s32.totalorder %s15, 0
      %p131 = por %p129, %p130
      %p132 = scmp.ne.s32.totalorder %s121, %s124
      %p133 = scmp.eq.s32.totalorder %s20, 1
      %p134 = por %p132, %p133
      %p135 = scmp.ne.s32.totalorder %s124, %s125
      %p136 = scmp.eq.s32.totalorder %s20, 0
      %p137 = por %p135, %p136
      %p138 = scmp.ne.s32.totalorder %s124, %s125
      %p139 = scmp.eq.s32.totalorder %s21, 1
      %p140 = por %p138, %p139
      %p142 = scmp.ne.s32.totalorder %s125, %s141
      %p143 = scmp.eq.s32.totalorder %s21, 0
      %p144 = por %p142, %p143
      %p145 = scmp.le.s32.totalorder 1, %s15
      %p146 = scmp.lt.s32.totalorder %s15, 3
      %p147 = pnand %p145, %p146
      %p148 = pneg %p147
      // Predicated region
      $region9: #{run.1} parent=5 // pred_check
        _
      $region10: #{run.1} parent=5 // pred_check_branch
        %150 = sbr.rel (%p147) target = $region12
      $region11: #{run.1} parent=5 // pred_region
        %s151 = ssub.s32 %s15, 1
      $region12: #{run.1} parent=5 // pred_fallthru
        _
      %p152 = scmp.lt.s32.totalorder %s15, 2
      // Predicated region
      $region13: #{run.1} parent=5 // pred_check
        %p153 = pneg %p152
      $region14: #{run.1} parent=5 // pred_check_branch
        %155 = sbr.rel (%p153) target = $region16
      $region15: #{run.1} parent=5 // pred_region
        // Predicated region
        $region17: #{run.1} parent=15 // pred_check
          %p156 = pneg %p49
        $region18: #{run.1} parent=15 // pred_check_branch
          %158 = sbr.rel (%p156) target = $region20
        $region19: #{run.1} parent=15 // pred_region
          %s159 = sand.u32 %s39, 1
          %s160 = scalar_lea.sflag [#allocation3], %s159
          %s161 = sand.u32 %s39, 1
          %s162 = smul.addr %s161, 16
          %s163 = scalar_lea.vmem [#allocation2], %s162
          %s164 = sadd.s32 %s22, %s23
          %s165 = smul.u32 2, %s164
          %167 = vsyncadd %s160, 0
          %s168 = smul.addr %s165, 8
          %s169 = scalar_lea.hbm %s0, %s168
          %s170 = sshll.u32 %s169, 4
          %s171 = int_to_ptr.hbm [resolvable:$true] %s170
          %s172 = sshll.u32 %s163, 4
          %s173 = int_to_ptr.vmem [resolvable:$true] %s172
          %178 = dma.hbm_to_vmem [thread:$0]  %s171, 256, %s173, %s160, 128, 128, 8
        $region20: #{run.1} parent=15 // pred_fallthru
          _
        // Predicated region
        $region21: #{run.1} parent=15 // pred_check
          %p179 = pneg %p77
        $region22: #{run.1} parent=15 // pred_check_branch
          %181 = sbr.rel (%p179) target = $region24
        $region23: #{run.1} parent=15 // pred_region
          %s182 = sand.u32 %s15, 1
          %s183 = scalar_lea.sflag [#allocation5], %s182
          %s184 = sand.u32 %s67, 1
          %s185 = smul.addr %s184, 16
          %s186 = scalar_lea.vmem [#allocation4], %s185
          %s187 = sadd.s32 %s22, %s23
          %s188 = smul.u32 2, %s187
          %190 = vsyncadd %s183, 0
          %s191 = smul.addr %s188, 8
          %s192 = scalar_lea.hbm %s1, %s191
          %s193 = sshll.u32 %s192, 4
          %s194 = int_to_ptr.hbm [resolvable:$true] %s193
          %s195 = sshll.u32 %s186, 4
          %s196 = int_to_ptr.vmem [resolvable:$true] %s195
          %201 = dma.hbm_to_vmem [thread:$0]  %s194, 256, %s196, %s183, 128, 128, 8
        $region24: #{run.1} parent=15 // pred_fallthru
          _
        // Predicated region
        $region25: #{run.1} parent=15 // pred_check
          %p202 = pneg %p105
        $region26: #{run.1} parent=15 // pred_check_branch
          %204 = sbr.rel (%p202) target = $region28
        $region27: #{run.1} parent=15 // pred_region
          %s205 = sand.u32 %s15, 1
          %s206 = scalar_lea.sflag [#allocation5], %s205
          %s207 = sand.u32 %s95, 1
          %s208 = smul.addr %s207, 16
          %s209 = scalar_lea.vmem [#allocation6], %s208
          %s210 = sadd.s32 %s22, %s23
          %s211 = smul.u32 2, %s210
          %213 = vsyncadd %s206, 0
          %s214 = smul.addr %s211, 8
          %s215 = scalar_lea.hbm %s2, %s214
          %s216 = sshll.u32 %s215, 4
          %s217 = int_to_ptr.hbm [resolvable:$true] %s216
          %s218 = sshll.u32 %s209, 4
          %s219 = int_to_ptr.vmem [resolvable:$true] %s218
          %224 = dma.hbm_to_vmem [thread:$0]  %s217, 256, %s219, %s206, 128, 128, 8
        $region28: #{run.1} parent=15 // pred_fallthru
          _
      $region16: #{run.1} parent=5 // pred_fallthru
        _
      %p225 = scmp.le.s32.totalorder 1, %s15
      %p226 = scmp.lt.s32.totalorder %s15, 3
      %p227 = pnand %p225, %p226
      %p228 = pneg %p227
      // Predicated region
      $region29: #{run.1} parent=5 // pred_check
        _
      $region30: #{run.1} parent=5 // pred_check_branch
        %230 = sbr.rel (%p227) target = $region32
      $region31: #{run.1} parent=5 // pred_region
        %s231 = ssub.s32 %s15, 1
        %s232 = sand.u32 %s42, 1
        %s233 = scalar_lea.sflag [#allocation3], %s232
        %s234 = sand.u32 %s42, 1
        %s235 = smul.addr %s234, 16
        %s236 = scalar_lea.vmem [#allocation2], %s235
        // Predicated region
        $region33: #{run.1} parent=31 // pred_check
          %p237 = pneg %p55
        $region34: #{run.1} parent=31 // pred_check_branch
          %239 = sbr.rel (%p237) target = $region36
        $region35: #{run.1} parent=31 // pred_region
          %241 = dma.done %s233, 256
        $region36: #{run.1} parent=31 // pred_fallthru
          _
        %s242 = sand.u32 %s20, 1
        %s243 = scalar_lea.sflag [#allocation5], %s242
        %s244 = sand.u32 %s70, 1
        %s245 = smul.addr %s244, 16
        %s246 = scalar_lea.vmem [#allocation4], %s245
        // Predicated region
        $region37: #{run.1} parent=31 // pred_check
          %p247 = pneg %p83
        $region38: #{run.1} parent=31 // pred_check_branch
          %249 = sbr.rel (%p247) target = $region40
        $region39: #{run.1} parent=31 // pred_region
          %251 = dma.done %s243, 256
        $region40: #{run.1} parent=31 // pred_fallthru
          _
        %s252 = sand.u32 %s20, 1
        %s253 = scalar_lea.sflag [#allocation5], %s252
        %s254 = sand.u32 %s98, 1
        %s255 = smul.addr %s254, 16
        %s256 = scalar_lea.vmem [#allocation6], %s255
        // Predicated region
        $region41: #{run.1} parent=31 // pred_check
          %p257 = pneg %p111
        $region42: #{run.1} parent=31 // pred_check_branch
          %259 = sbr.rel (%p257) target = $region44
        $region43: #{run.1} parent=31 // pred_region
          %261 = dma.done %s253, 256
        $region44: #{run.1} parent=31 // pred_fallthru
          _
        %s262 = sand.u32 %s42, 1
        %s263 = scalar_lea.sflag [#allocation3], %s262
        %s264 = sand.u32 %s42, 1
        %s265 = smul.addr %s264, 16
        %s266 = scalar_lea.vmem [#allocation2], %s265
        %p267 = pneg %p55
        %p268 = pneg %p52
        %s269 = sand.u32 %s20, 1
        %s270 = scalar_lea.sflag [#allocation5], %s269
        %s271 = sand.u32 %s70, 1
        %s272 = smul.addr %s271, 16
        %s273 = scalar_lea.vmem [#allocation4], %s272
        %p274 = pneg %p83
        %p275 = pneg %p80
        %s276 = sand.u32 %s20, 1
        %s277 = scalar_lea.sflag [#allocation5], %s276
        %s278 = sand.u32 %s98, 1
        %s279 = smul.addr %s278, 16
        %s280 = scalar_lea.vmem [#allocation6], %s279
        %p281 = pneg %p111
        %p282 = pneg %p108
        %p283 = pneg %p137
        %p284 = pneg %p134
        %p285 = scmp.lt.s32.totalorder %s24, 1
        %s286 = scalar_select %p285, %s24, 1
        %s287 = smul.addr %s286, 8
        %s288 = scalar_lea.vmem %s3, %s287
        %s289 = sadd.s32 %s24, %s25
        %s290 = smul.u32 2, %s289
        %s291 = sadd.s32 %s24, %s25
        %s292 = smul.u32 2, %s291
        %s293 = sadd.s32 %s24, %s25
        %s294 = smul.u32 2, %s293
        %p295 = scmp.lt.s32.totalorder %s24, 1
        %s296 = scalar_select %p295, %s24, 1
        %s297 = smul.addr %s296, 8
        %s298 = scalar_lea.vmem %s3, %s297
        %p299 = scmp.eq.s32.totalorder %s25, 0
        // Predicated region
        $region45: #{run.1} parent=31 // pred_check
          %p300 = pneg %p299
        $region46: #{run.1} parent=31 // pred_check_branch
          %302 = sbr.rel (%p300) target = $region48
        $region47: #{run.1} parent=31 // pred_region
          %303 = vst [vmem:[%s298] sm:$0xff] 0.0
        $region48: #{run.1} parent=31 // pred_fallthru
          _
        %v304 = vld [vmem:[%s236] sm:$0xff]
        %v305 = vld [vmem:[%s236 + $0x8] sm:$0xff]
        %v306 = vld [vmem:[%s246] sm:$0xff]
        %v307 = vld [vmem:[%s246 + $0x8] sm:$0xff]
        %v308 = vsub.f32 %v304, %v306
        %v309 = vsub.f32 %v305, %v307
        %v310 = vld [vmem:[%s298] sm:$0xff]
        %v311 = vld [vmem:[%s256] sm:$0xff]
        %v312 = vld [vmem:[%s256 + $0x8] sm:$0xff]
        %v313 = vmul.f32 %v311, %v308
        %v314 = vmul.f32 %v312, %v309
        %v315 = vmul.f32 %v313, %v308
        %v316 = vmul.f32 %v314, %v309
        %v317 = vadd.f32 %v315, %v316
        %v318 = vadd.f32 %v310, %v317
        %319 = vst [vmem:[%s298] sm:$0xff] %v318
        %p320 = scmp.lt.s32.totalorder %s24, 1
        %s321 = scalar_select %p320, %s24, 1
        %s322 = smul.addr %s321, 8
        %s323 = scalar_lea.vmem %s3, %s322
        // Predicated region
        $region49: #{run.1} parent=31 // pred_check
          %p324 = pneg %p134
        $region50: #{run.1} parent=31 // pred_check_branch
          %326 = sbr.rel (%p324) target = $region52
        $region51: #{run.1} parent=31 // pred_region
          _
        $region52: #{run.1} parent=31 // pred_fallthru
          _
      $region32: #{run.1} parent=5 // pred_fallthru
        _
      %p327 = scmp.le.s32.totalorder 2, %s15
      // Predicated region
      $region53: #{run.1} parent=5 // pred_check
        %p328 = pneg %p327
      $region54: #{run.1} parent=5 // pred_check_branch
        %330 = sbr.rel (%p328) target = $region56
      $region55: #{run.1} parent=5 // pred_region
        %s331 = ssub.s32 %s15, 2
        // Predicated region
        $region57: #{run.1} parent=55 // pred_check
          %p332 = pneg %p140
        $region58: #{run.1} parent=55 // pred_check_branch
          %334 = sbr.rel (%p332) target = $region60
        $region59: #{run.1} parent=55 // pred_region
          %p335 = scmp.lt.s32.totalorder %s26, 1
          %s336 = scalar_select %p335, %s26, 1
          %s337 = smul.addr %s336, 8
          %s338 = scalar_lea.vmem %s3, %s337
        $region60: #{run.1} parent=55 // pred_fallthru
          _
      $region56: #{run.1} parent=5 // pred_fallthru
        _
    $region6: #{run.1} parent=1 // loop_footer
      %s19 = sadd.s32 1, %s15
    $region7: #{run.1} parent=1 // loop_footer_branch
      %14 = sbr.rel target = $region3
    $region8: #{run.1} parent=1 // loop_exit
      _
    %339 = vsyncpa [#allocation3], 1
    %s340 = scalar_lea.sflag [#allocation3], 1
    %341 = vsyncpa %s340, 1
    %342 = vsyncpa [#allocation5], 1
    %s343 = scalar_lea.sflag [#allocation5], 1
    %344 = vsyncpa %s343, 1

</llo_original>
